<compile_context>
chip_gen: v6e
topology: v6e:2x2x1
jax: 0.10.0
libtpu: 0.0.40
codegen_flags: <defaults>
</compile_context>

<pallas_src>
import functools

import jax
import jax.numpy as jnp
from jax import lax
from jax.experimental import pallas as pl
from jax.experimental.pallas import tpu as pltpu


def _self_attn_flash_kernel(xq_ref, xk_ref, out_ref, *scratch,
                            acc_in_out, exp_dtype, mxu_dtype,
                            n_valid, tk, needs_mask, exact_recip):
    """One (batch, q-tile, kv-tile) grid step.

    xq_ref : (1, Cp, Tq)  query-side slab (resident across the kv axis)
    xk_ref : (1, Cp, Tk)  key/value-side slab (streams along kv)
    out_ref: (1, Cp, Tq)  output tile (resident across kv; doubles as the
                          accumulator when acc_in_out)
    scratch: [acc (Cp,Tq) f32 (only when not acc_in_out)], m (1,Tq), l (1,Tq)
    """
    if acc_in_out:
        m_ref, l_ref = scratch
        acc_ref = None
    else:
        acc_ref, m_ref, l_ref = scratch

    kv = pl.program_id(2)

    @pl.when(kv == 0)
    def _init():
        m_ref[...] = jnp.full_like(m_ref, -jnp.inf)
        l_ref[...] = jnp.zeros_like(l_ref)
        if acc_in_out:
            out_ref[...] = jnp.zeros_like(out_ref)
        else:
            acc_ref[...] = jnp.zeros_like(acc_ref)

    xq = xq_ref[0]                                       # (Cp, Tq), mxu_dtype
    xk = xk_ref[0]                                       # (Cp, Tk), mxu_dtype

    # s[k, q] = energy[q, k] = sum_c x[c, k] * x[c, q]   (contract on C, no .T)
    s = lax.dot_general(
        xk, xq,
        dimension_numbers=(((0,), (0,)), ((), ())),
        preferred_element_type=jnp.float32)              # (Tk, Tq) f32

    if needs_mask:
        # Keys beyond the true sequence length are padding: mask to -inf.
        k_ids = kv * tk + lax.broadcasted_iota(jnp.int32, s.shape, 0)
        s = jnp.where(k_ids < n_valid, s, -jnp.inf)

    # Online softmax over keys (axis 0 of s); normalization deferred to finalize.
    m_prev = m_ref[...]                                  # (1, Tq)
    m_new = jnp.maximum(m_prev, jnp.max(s, axis=0, keepdims=True))
    alpha = jnp.exp(m_prev - m_new)                      # (1, Tq) f32
    p = jnp.exp((s - m_new).astype(exp_dtype))           # (Tk, Tq) un-normalized

    # Denominator always accumulated in f32.
    l_ref[...] = alpha * l_ref[...] + jnp.sum(
        p, axis=0, keepdims=True, dtype=jnp.float32)

    p_mm = p if p.dtype == mxu_dtype else p.astype(mxu_dtype)
    upd = jnp.dot(xk, p_mm, preferred_element_type=jnp.float32)  # (Cp, Tq) f32

    if acc_in_out:
        out_ref[0] = alpha * out_ref[0] + upd
    else:
        acc_ref[...] = alpha * acc_ref[...] + upd
    m_ref[...] = m_new

    @pl.when(kv == pl.num_programs(2) - 1)
    def _finalize():
        if exact_recip:
            inv_l = 1.0 / l_ref[...]                     # exact on the f32 path
        else:
            inv_l = pl.reciprocal(l_ref[...], approx=True)  # EUP slot
        if acc_in_out:
            out_ref[0] = out_ref[0] * inv_l
        else:
            out_ref[0] = (acc_ref[...] * inv_l).astype(out_ref.dtype)


def _default_exp_dtype(mxu_dtype):
    """bf16 exp only where the EUP/VPU are bf16-capable (v6e / v7x)."""
    if jnp.dtype(mxu_dtype) != jnp.dtype(jnp.bfloat16):
        return jnp.float32
    try:
        kind = jax.devices()[0].device_kind.lower()
    except Exception:
        return jnp.float32
    return jnp.bfloat16 if ("v6" in kind or "v7" in kind) else jnp.float32


def _vmem_estimate(cp, tq, tk, in_dsz, out_dsz, acc_in_out, exp_dsz):
    slabs = 2 * cp * (tq + tk) * in_dsz        # double-buffered xq + xk
    outb = 2 * cp * tq * out_dsz               # double-buffered output tile
    acc = 0 if acc_in_out else cp * tq * 4     # f32 accumulator scratch
    small = 2 * tq * 4                         # m, l
    tiles = tq * tk * (4 + 4 + exp_dsz)        # s (f32) + working copy + p
    return slabs + outb + acc + small + tiles


def self_attn(x, *, tq=None, tk=None, mxu_dtype=jnp.bfloat16, exp_dtype=None):
    """Parameter-free self-attention. x: (B, C, N) -> out: (B, C, N)."""
    B, C, N = x.shape
    mxu_dtype = jnp.dtype(mxu_dtype)
    if exp_dtype is None:
        exp_dtype = _default_exp_dtype(mxu_dtype)
    exp_dtype = jnp.dtype(exp_dtype)

    out_dtype = x.dtype
    in_dsz = mxu_dtype.itemsize
    out_dsz = jnp.dtype(out_dtype).itemsize
    exp_dsz = exp_dtype.itemsize
    acc_in_out = jnp.dtype(out_dtype) == jnp.dtype(jnp.float32)
    exact_recip = mxu_dtype == jnp.dtype(jnp.float32)

    # Pad N to a multiple of 128: lane-dense (unmasked) stores and (8,128)-aligned
    # s/p tiles. Padded keys are masked to -inf in-kernel; padded query columns
    # and padded channel rows are sliced off below.
    n_pad = (-N) % 128
    Np = N + n_pad

    # Pad C to the sublane-packing multiple of the MXU dtype (8 rows per f32
    # vreg, 16 for bf16). Zero rows do not change energy; padded output rows
    # are zero and sliced off.
    c_mult = 8 * max(1, 4 // in_dsz)
    c_pad = (-C) % c_mult
    Cp = C + c_pad

    # Tile sizes: the kernel is EUP/VPU-bound for realistic C, so pick the
    # largest tile (<=512) that divides Np and stays within a conservative
    # VMEM budget (v7x has only 64 MiB physical VMEM).
    budget = 40 << 20

    def _pick(requested):
        if requested is not None:
            assert Np % requested == 0, "tile size must divide padded N"
            return requested
        for cand in (512, 256, 128):
            if Np % cand == 0 and _vmem_estimate(
                    Cp, cand, cand, in_dsz, out_dsz, acc_in_out, exp_dsz) <= budget:
                return cand
        return 128

    tq, tk = _pick(tq), _pick(tk)

    # Megacore balance: make sure the parallel space B*(Np//tq) covers both
    # TensorCores on dual-TC chips when possible.
    while B * (Np // tq) < 2 and tq > 128 and Np % (tq // 2) == 0:
        tq //= 2

    est = _vmem_estimate(Cp, tq, tk, in_dsz, out_dsz, acc_in_out, exp_dsz)
    vmem_limit = int(min(64 << 20, max(32 << 20, est + (16 << 20))))

    # One cast + pad in the wrapper: halves input DMA/VMEM when mxu_dtype=bf16
    # and removes the per-step in-kernel cast passes.
    x_in = x.astype(mxu_dtype) if x.dtype != mxu_dtype else x
    if c_pad or n_pad:
        x_in = jnp.pad(x_in, ((0, 0), (0, c_pad), (0, n_pad)))

    kernel = functools.partial(
        _self_attn_flash_kernel,
        acc_in_out=acc_in_out,
        exp_dtype=exp_dtype,
        mxu_dtype=mxu_dtype,
        n_valid=N,
        tk=tk,
        needs_mask=(n_pad > 0),
        exact_recip=exact_recip,
    )

    scratch_shapes = [
        pltpu.VMEM((1, tq), jnp.float32),   # running max m
        pltpu.VMEM((1, tq), jnp.float32),   # running sum l
    ]
    if not acc_in_out:
        scratch_shapes = [pltpu.VMEM((Cp, tq), jnp.float32)] + scratch_shapes

    out = pl.pallas_call(
        kernel,
        out_shape=jax.ShapeDtypeStruct((B, Cp, Np), out_dtype),
        grid_spec=pltpu.PrefetchScalarGridSpec(
            num_scalar_prefetch=0,
            grid=(B, Np // tq, Np // tk),
            in_specs=[
                # query-side slab: resident across the kv axis
                pl.BlockSpec((1, Cp, tq), lambda b, qi, ki: (b, 0, qi)),
                # key/value-side slab: streams along kv
                pl.BlockSpec((1, Cp, tk), lambda b, qi, ki: (b, 0, ki)),
            ],
            out_specs=pl.BlockSpec((1, Cp, tq), lambda b, qi, ki: (b, 0, qi)),
            scratch_shapes=scratch_shapes,
        ),
        compiler_params=pltpu.CompilerParams(
            dimension_semantics=("parallel", "parallel", "arbitrary"),
            vmem_limit_bytes=vmem_limit,
        ),
    )(x_in, x_in)

    if c_pad or n_pad:
        out = out[:, :C, :N]
    return out


def self_attn_ref(x):
    """Pure-JAX reference of the PyTorch forward."""
    proj_query = jnp.transpose(x, (0, 2, 1))             # (B, N, C)
    energy = jnp.einsum("bnc,bcm->bnm", proj_query, x)   # (B, N, N)
    attention = jax.nn.softmax(energy, axis=-1)
    out = jnp.einsum("bcn,bmn->bcm", x, attention)       # x @ attention^T
    return out


if __name__ == "__main__":
    # 3-D input as required by permute(0,2,1) / torch.bmm in the PyTorch module.
    B, C, N = 2, 4, 256
    key = jax.random.PRNGKey(0)
    x = jax.random.normal(key, (B, C, N), dtype=jnp.float32)

    ref = self_attn_ref(x)

    # Exact path: f32 MXU operands, exact reciprocal — tight check of the
    # flash / online-softmax math.
    out_f32 = jax.block_until_ready(self_attn(x, mxu_dtype=jnp.float32))
    assert out_f32.shape == (B, C, N)
    assert jnp.allclose(out_f32, ref, atol=5e-3, rtol=5e-3), "f32 path mismatch"

    # Fast path: bf16 MXU operands (cast once in the wrapper), f32 accumulation.
    out_bf16 = jax.block_until_ready(self_attn(x))
    rel_l2 = jnp.linalg.norm(out_bf16 - ref) / jnp.linalg.norm(ref)
    assert out_bf16.shape == (B, C, N)
    assert rel_l2 < 3e-2, f"bf16 path rel L2 error too large: {rel_l2}"

    # Ragged-N path: exercises N padding to a 128 multiple + key masking.
    x2 = jax.random.normal(jax.random.PRNGKey(1), (1, C, 200), dtype=jnp.float32)
    ref2 = self_attn_ref(x2)
    out2 = jax.block_until_ready(self_attn(x2))
    rel_l2_2 = jnp.linalg.norm(out2 - ref2) / jnp.linalg.norm(ref2)
    assert out2.shape == x2.shape
    assert rel_l2_2 < 3e-2, f"ragged-N path rel L2 error too large: {rel_l2_2}"

    print("KERNEL_OK")
</pallas_src>

<mosaic_0001>
module attributes {stable_mosaic.version = 11 : i64} {
  func.func @_self_attn_flash_kernel(%arg0: i32, %arg1: i32, %arg2: i32, %arg3: memref<1x8x256xf32, #tpu.memory_space<vmem>>, %arg4: memref<1x8x256xf32, #tpu.memory_space<vmem>>, %arg5: memref<1x8x256xf32, #tpu.memory_space<vmem>>, %arg6: memref<1x256xf32, #tpu.memory_space<vmem>>, %arg7: memref<1x256xf32, #tpu.memory_space<vmem>>) attributes {dimension_semantics = [#tpu.dimension_semantics<parallel>, #tpu.dimension_semantics<parallel>, #tpu.dimension_semantics<arbitrary>], iteration_bounds = array<i64: 2, 1, 1>, scalar_prefetch = 0 : i64, scratch_operands = 2 : i64, tpu.core_type = #tpu.core_type<tc>, window_params = [{transform_indices = @transform_0, window_bounds = array<i64: 1, 8, 256>}, {transform_indices = @transform_1, window_bounds = array<i64: 1, 8, 256>}, {transform_indices = @transform_2, window_bounds = array<i64: 1, 8, 256>}]} {
    %c0_i32 = arith.constant 0 : i32
    %0 = arith.cmpi eq, %arg2, %c0_i32 : i32
    %1 = arith.extui %0 : i1 to i32
    %c0_i32_0 = arith.constant 0 : i32
    %2 = arith.cmpi ne, %1, %c0_i32_0 : i32
    scf.if %2 {
      %cst_25 = arith.constant 0xFF800000 : f32
      %36 = vector.broadcast %cst_25 : f32 to vector<1x256xf32>
      %c0_26 = arith.constant 0 : index
      %c0_27 = arith.constant 0 : index
      %37 = vector.load %arg6[%c0_26, %c0_27] : memref<1x256xf32, #tpu.memory_space<vmem>>, vector<1x256xf32>
      tpu.vector_store %arg6[%c0_26, %c0_27], %36 {strides = array<i32>} : memref<1x256xf32, #tpu.memory_space<vmem>>, vector<1x256xf32>,
      %cst_28 = arith.constant 0.000000e+00 : f32
      %38 = vector.broadcast %cst_28 : f32 to vector<1x256xf32>
      %c0_29 = arith.constant 0 : index
      %c0_30 = arith.constant 0 : index
      %39 = vector.load %arg7[%c0_29, %c0_30] : memref<1x256xf32, #tpu.memory_space<vmem>>, vector<1x256xf32>
      tpu.vector_store %arg7[%c0_29, %c0_30], %38 {strides = array<i32>} : memref<1x256xf32, #tpu.memory_space<vmem>>, vector<1x256xf32>,
      %cst_31 = arith.constant 0.000000e+00 : f32
      %40 = vector.broadcast %cst_31 : f32 to vector<1x8x256xf32>
      %c0_32 = arith.constant 0 : index
      %c0_33 = arith.constant 0 : index
      %c0_34 = arith.constant 0 : index
      %41 = vector.load %arg5[%c0_32, %c0_33, %c0_34] : memref<1x8x256xf32, #tpu.memory_space<vmem>>, vector<1x8x256xf32>
      tpu.vector_store %arg5[%c0_32, %c0_33, %c0_34], %40 {strides = array<i32>} : memref<1x8x256xf32, #tpu.memory_space<vmem>>, vector<1x8x256xf32>,
    } else {
    }
    %c0 = arith.constant 0 : index
    %c0_1 = arith.constant 0 : index
    %c0_2 = arith.constant 0 : index
    %3 = vector.load %arg3[%c0, %c0_1, %c0_2] : memref<1x8x256xf32, #tpu.memory_space<vmem>>, vector<1x8x256xf32>
    %4 = vector.shape_cast %3 : vector<1x8x256xf32> to vector<8x256xf32>
    %c0_3 = arith.constant 0 : index
    %c0_4 = arith.constant 0 : index
    %c0_5 = arith.constant 0 : index
    %5 = vector.load %arg4[%c0_3, %c0_4, %c0_5] : memref<1x8x256xf32, #tpu.memory_space<vmem>>, vector<1x8x256xf32>
    %6 = vector.shape_cast %5 : vector<1x8x256xf32> to vector<8x256xf32>
    %cst = arith.constant dense<0.000000e+00> : vector<256x256xf32>
    %7 = tpu.matmul %6, %4, %cst {dimension_numbers = #tpu.dot_dimension_numbers<[0], [0], [1], [1], [0, 1, 1, 1], [], []>} : vector<8x256xf32>, vector<8x256xf32>, vector<256x256xf32> -> vector<256x256xf32>
    %c0_6 = arith.constant 0 : index
    %c0_7 = arith.constant 0 : index
    %8 = vector.load %arg6[%c0_6, %c0_7] : memref<1x256xf32, #tpu.memory_space<vmem>>, vector<1x256xf32>
    %cst_8 = arith.constant dense<0xFF800000> : vector<256xf32>
    %9 = vector.multi_reduction <maximumf>, %7, %cst_8 [0] : vector<256x256xf32> to vector<256xf32>
    %10 = vector.shape_cast %9 : vector<256xf32> to vector<1x256xf32>
    %11 = arith.maximumf %8, %10 : vector<1x256xf32>
    %12 = arith.subf %8, %11 : vector<1x256xf32>
    %13 = math.exp %12 : vector<1x256xf32>
    %14 = vector.broadcast %11 : vector<1x256xf32> to vector<256x256xf32>
    %15 = arith.subf %7, %14 : vector<256x256xf32>
    %16 = math.exp %15 : vector<256x256xf32>
    %c0_9 = arith.constant 0 : index
    %c0_10 = arith.constant 0 : index
    %17 = vector.load %arg7[%c0_9, %c0_10] : memref<1x256xf32, #tpu.memory_space<vmem>>, vector<1x256xf32>
    %18 = arith.mulf %13, %17 : vector<1x256xf32>
    %cst_11 = arith.constant dense<0.000000e+00> : vector<256xf32>
    %19 = vector.multi_reduction <add>, %16, %cst_11 [0] : vector<256x256xf32> to vector<256xf32>
    %20 = vector.shape_cast %19 : vector<256xf32> to vector<1x256xf32>
    %21 = arith.addf %18, %20 : vector<1x256xf32>
    %c0_12 = arith.constant 0 : index
    %c0_13 = arith.constant 0 : index
    %22 = vector.load %arg7[%c0_12, %c0_13] : memref<1x256xf32, #tpu.memory_space<vmem>>, vector<1x256xf32>
    tpu.vector_store %arg7[%c0_12, %c0_13], %21 {strides = array<i32>} : memref<1x256xf32, #tpu.memory_space<vmem>>, vector<1x256xf32>,
    %cst_14 = arith.constant dense<0.000000e+00> : vector<8x256xf32>
    %23 = tpu.matmul %6, %16, %cst_14 {dimension_numbers = #tpu.dot_dimension_numbers<[1], [0], [0], [1], [0, 0, 1, 1], [], []>} : vector<8x256xf32>, vector<256x256xf32>, vector<8x256xf32> -> vector<8x256xf32>
    %c0_15 = arith.constant 0 : index
    %c0_16 = arith.constant 0 : index
    %c0_17 = arith.constant 0 : index
    %24 = vector.load %arg5[%c0_15, %c0_16, %c0_17] : memref<1x8x256xf32, #tpu.memory_space<vmem>>, vector<1x8x256xf32>
    %25 = vector.shape_cast %24 : vector<1x8x256xf32> to vector<8x256xf32>
    %26 = vector.broadcast %13 : vector<1x256xf32> to vector<8x256xf32>
    %27 = arith.mulf %26, %25 : vector<8x256xf32>
    %28 = arith.addf %27, %23 : vector<8x256xf32>
    %c0_18 = arith.constant 0 : index
    %c0_19 = arith.constant 0 : index
    %c0_20 = arith.constant 0 : index
    %29 = vector.load %arg5[%c0_18, %c0_19, %c0_20] : memref<1x8x256xf32, #tpu.memory_space<vmem>>, vector<1x8x256xf32>
    %30 = vector.shape_cast %29 : vector<1x8x256xf32> to vector<8x256xf32>
    %31 = vector.shape_cast %28 : vector<8x256xf32> to vector<1x8x256xf32>
    tpu.vector_store %arg5[%c0_18, %c0_19, %c0_20], %31 {strides = array<i32>} : memref<1x8x256xf32, #tpu.memory_space<vmem>>, vector<1x8x256xf32>,
    %c0_21 = arith.constant 0 : index
    %c0_22 = arith.constant 0 : index
    %32 = vector.load %arg6[%c0_21, %c0_22] : memref<1x256xf32, #tpu.memory_space<vmem>>, vector<1x256xf32>
    tpu.vector_store %arg6[%c0_21, %c0_22], %11 {strides = array<i32>} : memref<1x256xf32, #tpu.memory_space<vmem>>, vector<1x256xf32>,
    %c0_i32_23 = arith.constant 0 : i32
    %33 = arith.cmpi eq, %arg2, %c0_i32_23 : i32
    %34 = arith.extui %33 : i1 to i32
    %c0_i32_24 = arith.constant 0 : i32
    %35 = arith.cmpi ne, %34, %c0_i32_24 : i32
    scf.if %35 {
      %c0_25 = arith.constant 0 : index
      %c0_26 = arith.constant 0 : index
      %36 = vector.load %arg7[%c0_25, %c0_26] : memref<1x256xf32, #tpu.memory_space<vmem>>, vector<1x256xf32>
      %cst_27 = arith.constant 1.000000e+00 : f32
      %37 = vector.broadcast %cst_27 : f32 to vector<1x256xf32>
      %38 = arith.divf %37, %36 : vector<1x256xf32>
      %c0_28 = arith.constant 0 : index
      %c0_29 = arith.constant 0 : index
      %c0_30 = arith.constant 0 : index
      %39 = vector.load %arg5[%c0_28, %c0_29, %c0_30] : memref<1x8x256xf32, #tpu.memory_space<vmem>>, vector<1x8x256xf32>
      %40 = vector.shape_cast %39 : vector<1x8x256xf32> to vector<8x256xf32>
      %41 = vector.broadcast %38 : vector<1x256xf32> to vector<8x256xf32>
      %42 = arith.mulf %40, %41 : vector<8x256xf32>
      %c0_31 = arith.constant 0 : index
      %c0_32 = arith.constant 0 : index
      %c0_33 = arith.constant 0 : index
      %43 = vector.load %arg5[%c0_31, %c0_32, %c0_33] : memref<1x8x256xf32, #tpu.memory_space<vmem>>, vector<1x8x256xf32>
      %44 = vector.shape_cast %43 : vector<1x8x256xf32> to vector<8x256xf32>
      %45 = vector.shape_cast %42 : vector<8x256xf32> to vector<1x8x256xf32>
      tpu.vector_store %arg5[%c0_31, %c0_32, %c0_33], %45 {strides = array<i32>} : memref<1x8x256xf32, #tpu.memory_space<vmem>>, vector<1x8x256xf32>,
    } else {
    }
    return
  }
  func.func @transform_0(%arg0: i32, %arg1: i32, %arg2: i32) -> (i32, i32, i32) {
    %c0_i32 = arith.constant 0 : i32
    %c0_i32_0 = arith.constant 0 : i32
    return %arg0, %c0_i32, %arg1 : i32, i32, i32
  }
  func.func @transform_1(%arg0: i32, %arg1: i32, %arg2: i32) -> (i32, i32, i32) {
    %c0_i32 = arith.constant 0 : i32
    %c0_i32_0 = arith.constant 0 : i32
    return %arg0, %c0_i32, %arg2 : i32, i32, i32
  }
  func.func @transform_2(%arg0: i32, %arg1: i32, %arg2: i32) -> (i32, i32, i32) {
    %c0_i32 = arith.constant 0 : i32
    %c0_i32_0 = arith.constant 0 : i32
    return %arg0, %c0_i32, %arg1 : i32, i32, i32
  }
}

</mosaic_0001>

<llo_original>
// kernel: tpu_custom_call.1
$region0: #{tpu_custom_call.1}
  #allocation0 [shape = 'u32[]', space=smem, size = 0x4, offset = 0x4, fixed_abs, tag = 'smem constant byte address 0x4 - core index']
  #allocation1 [shape = 'u32[144,128]{1,0:T(1,128)}', space=vmem, size = 0x12000, scoped, tag = 'internal scratch']
  #allocation2 [shape = 'f32[1,256]{1,0:T(1,128)}', space=vmem, size = 0x400, scoped, tag = 'scratch operand']
  #allocation3 [shape = 'f32[1,256]{1,0:T(1,128)}', space=vmem, size = 0x400, scoped, tag = 'scratch operand']
  %s0 = inlined_call_operand.hbm [shape: f32[2,8,256], index: 0, kind: input, shape index: {}]
  %s1 = inlined_call_operand.hbm [shape: f32[2,8,256], index: 1, kind: input, shape index: {}]
  %s2 = inlined_call_operand.hbm [shape: f32[2,8,256], index: 2, kind: output, shape index: {}]
  %s3 = sld [smem:[#allocation0]]
  $region57: #{tpu_custom_call.1} parent=0
    _
  %s5 = ssub.s32 1, %s3
  %s6 = scalar_select 0, %s5, %s3
  $region1: #{tpu_custom_call.1} parent=0
    #allocation4 [shape = 'u8[16384]{0}', space=vmem, size = 0x4000, scoped, tag = 'input window, operand 0']
    #allocation5 [shape = 's32[2]{0}', space=sflag, size = 0x8, scoped, tag = 'scoped memory for tpu_custom_call.1']
    #allocation6 [shape = 's32[2]{0}', space=sflag, size = 0x8, scoped, tag = 'scoped memory for tpu_custom_call.1']
    #allocation7 [shape = 'u8[16384]{0}', space=vmem, size = 0x4000, scoped, tag = 'input window, operand 1']
    #allocation8 [shape = 's32[2]{0}', space=sflag, size = 0x8, scoped, tag = 'scoped memory for tpu_custom_call.1']
    #allocation9 [shape = 'u8[16384]{0}', space=vmem, size = 0x4000, scoped, tag = 'output window, operand 0']
    %7 = vsyncpa [#allocation5], 0
    %s8 = scalar_lea.sflag [#allocation5], 1
    %9 = vsyncpa %s8, 0
    %10 = vsyncpa [#allocation8], 0
    %s11 = scalar_lea.sflag [#allocation8], 1
    %12 = vsyncpa %s11, 0
    %13 = vsyncpa [#allocation6], 0
    %s14 = scalar_lea.sflag [#allocation6], 1
    %15 = vsyncpa %s14, 0
    loop: start=0, step=1, limit=4
    $region2: #{tpu_custom_call.1} parent=1 // loop_pre_header
      _
    $region3: #{tpu_custom_call.1} parent=1 // loop_header
      %s17 = sphi 0, %s21
      %p18 = scmp.ge.s32.totalorder %s17, 4
      %s24 = sphi 0, %s43
      %s25 = sphi 0, %s39
      %s26 = sphi 0, %s35
      %s27 = sphi 0, %s24
      %s28 = sphi 0, %s25
      %s29 = sphi 0, %s26
      %s30 = sphi 0, %s27
      %s31 = sphi 0, %s28
      %s32 = sphi 0, %s29
      %s48 = sphi 0, %s50
      %s51 = sphi 0, %s48
      %s52 = sphi 0, %s51
      %s68 = sphi 0, %s52
      %s76 = sphi 0, %s78
      %s79 = sphi 0, %s76
      %s80 = sphi 0, %s79
      %s96 = sphi 0, %s80
      %s104 = sphi 0, %s106
      %s107 = sphi 0, %s104
      %s108 = sphi 0, %s107
      %s124 = sphi 0, %s108
    $region4: #{tpu_custom_call.1} parent=1 // loop_header_branch
      %20 = sbr.rel (%p18) target = $region8
    $region5: #{tpu_custom_call.1} parent=1 // loop_body
      %s22 = ssub.s32 %s17, 1
      %s23 = ssub.s32 %s17, 2
      %s33 = sadd.s32 1, %s26
      %p34 = scmp.ge.s32.totalorder %s33, 1
      %s35 = scalar_select %p34, 0, %s33
      %s36 = sadd.s32 1, %s25
      %s37 = scalar_select %p34, %s36, %s25
      %p38 = scmp.ge.s32.totalorder %s37, 1
      %s39 = scalar_select %p38, 0, %s37
      %s40 = sadd.s32 1, %s24
      %s41 = scalar_select %p38, %s40, %s24
      %p42 = scmp.ge.s32.totalorder %s41, 2
      %s43 = scalar_select %p42, 0, %s41
      %s44 = ssub.s32 %s24, %s43
      %s45 = ssub.s32 %s25, %s39
      %s46 = sor.u32 %s44, %s45
      %p47 = scmp.eq.s32.totalorder %s46, 0
      %s49 = sadd.s32 %s48, 1
      %s50 = scalar_select %p47, %s48, %s49
      %p53 = pneg %p47
      %p54 = scmp.eq.s32.totalorder %s17, 1
      %p55 = por %p53, %p54
      %p56 = scmp.ne.s32.totalorder %s48, %s51
      %p57 = scmp.eq.s32.totalorder %s17, 0
      %p58 = por %p56, %p57
      %p59 = scmp.ne.s32.totalorder %s48, %s51
      %p60 = scmp.eq.s32.totalorder %s22, 1
      %p61 = por %p59, %p60
      %p62 = scmp.ne.s32.totalorder %s51, %s52
      %p63 = scmp.eq.s32.totalorder %s22, 0
      %p64 = por %p62, %p63
      %p65 = scmp.ne.s32.totalorder %s51, %s52
      %p66 = scmp.eq.s32.totalorder %s23, 1
      %p67 = por %p65, %p66
      %p69 = scmp.ne.s32.totalorder %s52, %s68
      %p70 = scmp.eq.s32.totalorder %s23, 0
      %p71 = por %p69, %p70
      %s72 = ssub.s32 %s24, %s43
      %s73 = ssub.s32 %s26, %s35
      %s74 = sor.u32 %s72, %s73
      %p75 = scmp.eq.s32.totalorder %s74, 0
      %s77 = sadd.s32 %s76, 1
      %s78 = scalar_select %p75, %s76, %s77
      %p81 = pneg %p75
      %p82 = scmp.eq.s32.totalorder %s17, 1
      %p83 = por %p81, %p82
      %p84 = scmp.ne.s32.totalorder %s76, %s79
      %p85 = scmp.eq.s32.totalorder %s17, 0
      %p86 = por %p84, %p85
      %p87 = scmp.ne.s32.totalorder %s76, %s79
      %p88 = scmp.eq.s32.totalorder %s22, 1
      %p89 = por %p87, %p88
      %p90 = scmp.ne.s32.totalorder %s79, %s80
      %p91 = scmp.eq.s32.totalorder %s22, 0
      %p92 = por %p90, %p91
      %p93 = scmp.ne.s32.totalorder %s79, %s80
      %p94 = scmp.eq.s32.totalorder %s23, 1
      %p95 = por %p93, %p94
      %p97 = scmp.ne.s32.totalorder %s80, %s96
      %p98 = scmp.eq.s32.totalorder %s23, 0
      %p99 = por %p97, %p98
      %s100 = ssub.s32 %s24, %s43
      %s101 = ssub.s32 %s25, %s39
      %s102 = sor.u32 %s100, %s101
      %p103 = scmp.eq.s32.totalorder %s102, 0
      %s105 = sadd.s32 %s104, 1
      %s106 = scalar_select %p103, %s104, %s105
      %p109 = pneg %p103
      %p110 = scmp.eq.s32.totalorder %s17, 1
      %p111 = por %p109, %p110
      %p112 = scmp.ne.s32.totalorder %s104, %s107
      %p113 = scmp.eq.s32.totalorder %s17, 0
      %p114 = por %p112, %p113
      %p115 = scmp.ne.s32.totalorder %s104, %s107
      %p116 = scmp.eq.s32.totalorder %s22, 1
      %p117 = por %p115, %p116
      %p118 = scmp.ne.s32.totalorder %s107, %s108
      %p119 = scmp.eq.s32.totalorder %s22, 0
      %p120 = por %p118, %p119
      %p121 = scmp.ne.s32.totalorder %s107, %s108
      %p122 = scmp.eq.s32.totalorder %s23, 1
      %p123 = por %p121, %p122
      %p125 = scmp.ne.s32.totalorder %s108, %s124
      %p126 = scmp.eq.s32.totalorder %s23, 0
      %p127 = por %p125, %p126
      %p128 = scmp.le.s32.totalorder 1, %s17
      %p129 = scmp.lt.s32.totalorder %s17, 3
      %p130 = pnand %p128, %p129
      %p131 = pneg %p130
      // Predicated region
      $region9: #{tpu_custom_call.1} parent=5 // pred_check
        _
      $region10: #{tpu_custom_call.1} parent=5 // pred_check_branch
        %133 = sbr.rel (%p130) target = $region12
      $region11: #{tpu_custom_call.1} parent=5 // pred_region
        %s134 = ssub.s32 %s17, 1
      $region12: #{tpu_custom_call.1} parent=5 // pred_fallthru
        _
      %p135 = scmp.lt.s32.totalorder %s17, 2
      // Predicated region
      $region13: #{tpu_custom_call.1} parent=5 // pred_check
        %p136 = pneg %p135
      $region14: #{tpu_custom_call.1} parent=5 // pred_check_branch
        %138 = sbr.rel (%p136) target = $region16
      $region15: #{tpu_custom_call.1} parent=5 // pred_region
        // Predicated region
        $region17: #{tpu_custom_call.1} parent=15 // pred_check
          %p139 = pneg %p58
        $region18: #{tpu_custom_call.1} parent=15 // pred_check_branch
          %141 = sbr.rel (%p139) target = $region20
        $region19: #{tpu_custom_call.1} parent=15 // pred_region
          %s142 = sand.u32 %s48, 1
          %s143 = scalar_lea.sflag [#allocation5], %s142
          %s144 = sand.u32 %s48, 1
          %s145 = smul.addr %s144, 16
          %s146 = scalar_lea.vmem [#allocation4], %s145
          %s147 = smul.u32 2, %s25
          %s149 = ssub.s32 256, 256
          %150 = vsyncadd %s143, %s149
          %s151 = smul.addr %s24, 2
          %s152 = sadd.s32 %s147, %s151
          %s153 = smul.addr %s152, 128
          %s154 = scalar_lea.hbm %s0, %s153
          %s156 = sshll.u32 %s146, 4
          %s157 = int_to_ptr.vmem [resolvable:$true] %s156
          %159 = dma.hbm_to_vmem [thread:$0]  %s154, 256, %s157, %s143
        $region20: #{tpu_custom_call.1} parent=15 // pred_fallthru
          _
        // Predicated region
        $region21: #{tpu_custom_call.1} parent=15 // pred_check
          %p160 = pneg %p86
        $region22: #{tpu_custom_call.1} parent=15 // pred_check_branch
          %162 = sbr.rel (%p160) target = $region24
        $region23: #{tpu_custom_call.1} parent=15 // pred_region
          %s163 = sand.u32 %s76, 1
          %s164 = scalar_lea.sflag [#allocation8], %s163
          %s165 = sand.u32 %s76, 1
          %s166 = smul.addr %s165, 16
          %s167 = scalar_lea.vmem [#allocation7], %s166
          %s168 = smul.u32 2, %s26
          %s170 = ssub.s32 256, 256
          %171 = vsyncadd %s164, %s170
          %s172 = smul.addr %s24, 2
          %s173 = sadd.s32 %s168, %s172
          %s174 = smul.addr %s173, 128
          %s175 = scalar_lea.hbm %s1, %s174
          %s177 = sshll.u32 %s167, 4
          %s178 = int_to_ptr.vmem [resolvable:$true] %s177
          %180 = dma.hbm_to_vmem [thread:$0]  %s175, 256, %s178, %s164
        $region24: #{tpu_custom_call.1} parent=15 // pred_fallthru
          _
      $region16: #{tpu_custom_call.1} parent=5 // pred_fallthru
        _
      %p181 = scmp.le.s32.totalorder 1, %s17
      %p182 = scmp.lt.s32.totalorder %s17, 3
      %p183 = pnand %p181, %p182
      %p184 = pneg %p183
      // Predicated region
      $region25: #{tpu_custom_call.1} parent=5 // pred_check
        _
      $region26: #{tpu_custom_call.1} parent=5 // pred_check_branch
        %186 = sbr.rel (%p183) target = $region28
      $region27: #{tpu_custom_call.1} parent=5 // pred_region
        %s187 = ssub.s32 %s17, 1
        %s188 = sand.u32 %s51, 1
        %s189 = scalar_lea.sflag [#allocation5], %s188
        %s190 = sand.u32 %s51, 1
        %s191 = smul.addr %s190, 16
        %s192 = scalar_lea.vmem [#allocation4], %s191
        // Predicated region
        $region29: #{tpu_custom_call.1} parent=27 // pred_check
          %p193 = pneg %p64
        $region30: #{tpu_custom_call.1} parent=27 // pred_check_branch
          %195 = sbr.rel (%p193) target = $region32
        $region31: #{tpu_custom_call.1} parent=27 // pred_region
          %196 = dma.done %s189, 256
        $region32: #{tpu_custom_call.1} parent=27 // pred_fallthru
          _
        %s197 = sand.u32 %s79, 1
        %s198 = scalar_lea.sflag [#allocation8], %s197
        %s199 = sand.u32 %s79, 1
        %s200 = smul.addr %s199, 16
        %s201 = scalar_lea.vmem [#allocation7], %s200
        // Predicated region
        $region33: #{tpu_custom_call.1} parent=27 // pred_check
          %p202 = pneg %p92
        $region34: #{tpu_custom_call.1} parent=27 // pred_check_branch
          %204 = sbr.rel (%p202) target = $region36
        $region35: #{tpu_custom_call.1} parent=27 // pred_region
          %205 = dma.done %s198, 256
        $region36: #{tpu_custom_call.1} parent=27 // pred_fallthru
          _
        %s206 = sand.u32 %s51, 1
        %s207 = scalar_lea.sflag [#allocation5], %s206
        %s208 = sand.u32 %s51, 1
        %s209 = smul.addr %s208, 16
        %s210 = scalar_lea.vmem [#allocation4], %s209
        %p211 = pneg %p64
        %p212 = pneg %p61
        %s213 = sand.u32 %s79, 1
        %s214 = scalar_lea.sflag [#allocation8], %s213
        %s215 = sand.u32 %s79, 1
        %s216 = smul.addr %s215, 16
        %s217 = scalar_lea.vmem [#allocation7], %s216
        %p218 = pneg %p92
        %p219 = pneg %p89
        %p220 = pneg %p120
        %p221 = pneg %p117
        %s222 = sand.u32 %s107, 1
        %s223 = scalar_lea.sflag [#allocation6], %s222
        %s224 = sand.u32 %s107, 1
        %s225 = smul.addr %s224, 16
        %s226 = scalar_lea.vmem [#allocation9], %s225
        %s227 = smul.u32 2, %s28
        %s228 = smul.u32 2, %s29
        %s229 = smul.u32 2, %s28
        %p230 = scmp.eq.s32.totalorder %s29, 0
        // Predicated region
        $region37: #{tpu_custom_call.1} parent=27 // pred_check
          %p231 = pneg %p230
        $region38: #{tpu_custom_call.1} parent=27 // pred_check_branch
          %233 = sbr.rel (%p231) target = $region40
        $region39: #{tpu_custom_call.1} parent=27 // pred_region
          %v234 = vlaneseq
          %vm235 = vcmp.ge.s32.totalorder %v234, 0
          %vm236 = vcmp.lt.s32.totalorder %v234, 256
          %vm237 = vmand %vm235, %vm236
          %238 = vst.msk [vmem:[#allocation2] sm:$0x3] %vm237, -inf
          %239 = vst.msk [vmem:[#allocation3] sm:$0x3] %vm237, 0.0
          %240 = vst [vmem:[%s226] sm:$0xff] 0.0
          %241 = vst [vmem:[%s226 + $0x8] sm:$0xff] 0.0
        $region40: #{tpu_custom_call.1} parent=27 // pred_fallthru
          _
        %v242 = vld [vmem:[%s192] sm:$0xff]
        %v243 = vld [vmem:[%s192 + $0x8] sm:$0xff]
        %v244 = vld [vmem:[%s201] sm:$0xff]
        %v245 = vld [vmem:[%s201 + $0x8] sm:$0xff]
        %246 = vxpose.xlu0.b32.start [1/16] %v244, 128
        %247 = vxpose.xlu0.b32.cont [2/16] 0.0, 128
        %248 = vxpose.xlu0.b32.cont [3/16] 0.0, 128
        %249 = vxpose.xlu0.b32.cont [4/16] 0.0, 128
        %250 = vxpose.xlu0.b32.cont [5/16] 0.0, 128
        %251 = vxpose.xlu0.b32.cont [6/16] 0.0, 128
        %252 = vxpose.xlu0.b32.cont [7/16] 0.0, 128
        %253 = vxpose.xlu0.b32.cont [8/16] 0.0, 128
        %254 = vxpose.xlu0.b32.cont [9/16] 0.0, 128
        %255 = vxpose.xlu0.b32.cont [10/16] 0.0, 128
        %256 = vxpose.xlu0.b32.cont [11/16] 0.0, 128
        %257 = vxpose.xlu0.b32.cont [12/16] 0.0, 128
        %258 = vxpose.xlu0.b32.cont [13/16] 0.0, 128
        %259 = vxpose.xlu0.b32.cont [14/16] 0.0, 128
        %260 = vxpose.xlu0.b32.cont [15/16] 0.0, 128
        %261 = vxpose.xlu0.b32.end [16/16] 0.0, 128
        %v262 = vpop.trf.xlu0
        %v263 = vpop.trf.xlu0
        %v264 = vpop.trf.xlu0
        %v265 = vpop.trf.xlu0
        %v266 = vpop.trf.xlu0
        %v267 = vpop.trf.xlu0
        %v268 = vpop.trf.xlu0
        %v269 = vpop.trf.xlu0
        %v270 = vpop.trf.xlu0
        %v271 = vpop.trf.xlu0
        %v272 = vpop.trf.xlu0
        %v273 = vpop.trf.xlu0
        %v274 = vpop.trf.xlu0
        %v275 = vpop.trf.xlu0
        %v276 = vpop.trf.xlu0
        %v277 = vpop.trf.xlu0
        %278 = vxpose.xlu0.b32.start [1/16] %v245, 128
        %279 = vxpose.xlu0.b32.cont [2/16] 0.0, 128
        %280 = vxpose.xlu0.b32.cont [3/16] 0.0, 128
        %281 = vxpose.xlu0.b32.cont [4/16] 0.0, 128
        %282 = vxpose.xlu0.b32.cont [5/16] 0.0, 128
        %283 = vxpose.xlu0.b32.cont [6/16] 0.0, 128
        %284 = vxpose.xlu0.b32.cont [7/16] 0.0, 128
        %285 = vxpose.xlu0.b32.cont [8/16] 0.0, 128
        %286 = vxpose.xlu0.b32.cont [9/16] 0.0, 128
        %287 = vxpose.xlu0.b32.cont [10/16] 0.0, 128
        %288 = vxpose.xlu0.b32.cont [11/16] 0.0, 128
        %289 = vxpose.xlu0.b32.cont [12/16] 0.0, 128
        %290 = vxpose.xlu0.b32.cont [13/16] 0.0, 128
        %291 = vxpose.xlu0.b32.cont [14/16] 0.0, 128
        %292 = vxpose.xlu0.b32.cont [15/16] 0.0, 128
        %293 = vxpose.xlu0.b32.end [16/16] 0.0, 128
        %v294 = vpop.trf.xlu0
        %v295 = vpop.trf.xlu0
        %v296 = vpop.trf.xlu0
        %v297 = vpop.trf.xlu0
        %v298 = vpop.trf.xlu0
        %v299 = vpop.trf.xlu0
        %v300 = vpop.trf.xlu0
        %v301 = vpop.trf.xlu0
        %v302 = vpop.trf.xlu0
        %v303 = vpop.trf.xlu0
        %v304 = vpop.trf.xlu0
        %v305 = vpop.trf.xlu0
        %v306 = vpop.trf.xlu0
        %v307 = vpop.trf.xlu0
        %v308 = vpop.trf.xlu0
        %v309 = vpop.trf.xlu0
        %vm310 = vcmask 64512
        %v312 = vsel %vm310, %v262, 0
        %v315 = vsel %vm310, %v263, 0
        %v318 = vsel %vm310, %v264, 0
        %v321 = vsel %vm310, %v265, 0
        %v324 = vsel %vm310, %v266, 0
        %v327 = vsel %vm310, %v267, 0
        %v330 = vsel %vm310, %v268, 0
        %v333 = vsel %vm310, %v269, 0
        %v336 = vsel %vm310, %v270, 0
        %v339 = vsel %vm310, %v271, 0
        %v342 = vsel %vm310, %v272, 0
        %v345 = vsel %vm310, %v273, 0
        %v348 = vsel %vm310, %v274, 0
        %v351 = vsel %vm310, %v275, 0
        %v354 = vsel %vm310, %v276, 0
        %v357 = vsel %vm310, %v277, 0
        %v360 = vsel %vm310, %v294, 0
        %v363 = vsel %vm310, %v295, 0
        %v366 = vsel %vm310, %v296, 0
        %v369 = vsel %vm310, %v297, 0
        %v372 = vsel %vm310, %v298, 0
        %v375 = vsel %vm310, %v299, 0
        %v378 = vsel %vm310, %v300, 0
        %v381 = vsel %vm310, %v301, 0
        %v384 = vsel %vm310, %v302, 0
        %v387 = vsel %vm310, %v303, 0
        %v390 = vsel %vm310, %v304, 0
        %v393 = vsel %vm310, %v305, 0
        %v396 = vsel %vm310, %v306, 0
        %v399 = vsel %vm310, %v307, 0
        %v402 = vsel %vm310, %v308, 0
        %v405 = vsel %vm310, %v309, 0
        %407 = vmatprep.subr.mxu0 0.0
        %408 = vmatpush1.msra.mxu0 0.0
        %409 = vmatprep.subr.mxu0 0.0
        %410 = vmatpush1.msra.mxu0 0.0
        %411 = vmatprep.subr.mxu0 0.0
        %412 = vmatpush1.msra.mxu0 0.0
        %413 = vmatprep.subr.mxu0 0.0
        %414 = vmatpush1.msra.mxu0 0.0
        %415 = vmatprep.subr.mxu0 0.0
        %416 = vmatpush1.msra.mxu0 0.0
        %417 = vmatprep.subr.mxu0 0.0
        %418 = vmatpush1.msra.mxu0 0.0
        %419 = vmatprep.subr.mxu0 0.0
        %420 = vmatpush1.msra.mxu0 0.0
        %421 = vmatprep.subr.mxu0 0.0
        %422 = vmatpush1.msra.mxu0 0.0
        %423 = vmatprep.subr.mxu0 0.0
        %424 = vmatpush1.msra.mxu0 0.0
        %425 = vmatprep.subr.mxu0 0.0
        %426 = vmatpush1.msra.mxu0 0.0
        %427 = vmatprep.subr.mxu0 0.0
        %428 = vmatpush1.msra.mxu0 0.0
        %429 = vmatprep.subr.mxu0 0.0
        %430 = vmatpush1.msra.mxu0 0.0
        %431 = vmatprep.subr.mxu0 0.0
        %432 = vmatpush1.msra.mxu0 0.0
        %433 = vmatprep.subr.mxu0 0.0
        %434 = vmatpush1.msra.mxu0 0.0
        %435 = vmatprep.subr.mxu0 0.0
        %436 = vmatpush1.msra.mxu0 0.0
        %437 = vmatprep.subr.mxu0 %v243
        %438 = vmatpush1.msra.mxu0 %v242
        %439 = vmatprep.subr.mxu0 0.0
        %440 = vmatpush2.msra.mxu0 0.0
        %441 = vmatprep.subr.mxu0 0.0
        %442 = vmatpush2.msra.mxu0 0.0
        %443 = vmatprep.subr.mxu0 0.0
        %444 = vmatpush2.msra.mxu0 0.0
        %445 = vmatprep.subr.mxu0 0.0
        %446 = vmatpush2.msra.mxu0 0.0
        %447 = vmatprep.subr.mxu0 0.0
        %448 = vmatpush2.msra.mxu0 0.0
        %449 = vmatprep.subr.mxu0 0.0
        %450 = vmatpush2.msra.mxu0 0.0
        %451 = vmatprep.subr.mxu0 0.0
        %452 = vmatpush2.msra.mxu0 0.0
        %453 = vmatprep.subr.mxu0 0.0
        %454 = vmatpush2.msra.mxu0 0.0
        %455 = vmatprep.subr.mxu0 0.0
        %456 = vmatpush2.msra.mxu0 0.0
        %457 = vmatprep.subr.mxu0 0.0
        %458 = vmatpush2.msra.mxu0 0.0
        %459 = vmatprep.subr.mxu0 0.0
        %460 = vmatpush2.msra.mxu0 0.0
        %461 = vmatprep.subr.mxu0 0.0
        %462 = vmatpush2.msra.mxu0 0.0
        %463 = vmatprep.subr.mxu0 0.0
        %464 = vmatpush2.msra.mxu0 0.0
        %465 = vmatprep.subr.mxu0 0.0
        %466 = vmatpush2.msra.mxu0 0.0
        %467 = vmatprep.subr.mxu0 0.0
        %468 = vmatpush2.msra.mxu0 0.0
        %469 = vmatprep.subr.mxu0 0.0
        %470 = vmatpush2.msra.mxu0 0.0
        %471 = vmatprep.mubr.f32.mxu0 0.0
        %472 = vmatmul.mubr.f32.gmra.mxu0 %v312
        %v473 = vpop.f32.mrf.mxu0
        %v474 = vadd.f32 0.0, %v473
        %v475 = vpop.f32.mrf.mxu0
        %v476 = vadd.f32 0.0, %v475
        %477 = vmatprep.mubr.f32.mxu0 0.0
        %478 = vmatmul.mubr.f32.gmra.mxu0 %v315
        %v479 = vpop.f32.mrf.mxu0
        %v480 = vadd.f32 0.0, %v479
        %v481 = vpop.f32.mrf.mxu0
        %v482 = vadd.f32 0.0, %v481
        %483 = vmatprep.mubr.f32.mxu0 0.0
        %484 = vmatmul.mubr.f32.gmra.mxu0 %v318
        %v485 = vpop.f32.mrf.mxu0
        %v486 = vadd.f32 0.0, %v485
        %v487 = vpop.f32.mrf.mxu0
        %v488 = vadd.f32 0.0, %v487
        %489 = vmatprep.mubr.f32.mxu0 0.0
        %490 = vmatmul.mubr.f32.gmra.mxu0 %v321
        %v491 = vpop.f32.mrf.mxu0
        %v492 = vadd.f32 0.0, %v491
        %v493 = vpop.f32.mrf.mxu0
        %v494 = vadd.f32 0.0, %v493
        %495 = vmatprep.mubr.f32.mxu0 0.0
        %496 = vmatmul.mubr.f32.gmra.mxu0 %v324
        %v497 = vpop.f32.mrf.mxu0
        %v498 = vadd.f32 0.0, %v497
        %v499 = vpop.f32.mrf.mxu0
        %v500 = vadd.f32 0.0, %v499
        %501 = vmatprep.mubr.f32.mxu0 0.0
        %502 = vmatmul.mubr.f32.gmra.mxu0 %v327
        %v503 = vpop.f32.mrf.mxu0
        %v504 = vadd.f32 0.0, %v503
        %v505 = vpop.f32.mrf.mxu0
        %v506 = vadd.f32 0.0, %v505
        %507 = vmatprep.mubr.f32.mxu0 0.0
        %508 = vmatmul.mubr.f32.gmra.mxu0 %v330
        %v509 = vpop.f32.mrf.mxu0
        %v510 = vadd.f32 0.0, %v509
        %v511 = vpop.f32.mrf.mxu0
        %v512 = vadd.f32 0.0, %v511
        %513 = vmatprep.mubr.f32.mxu0 0.0
        %514 = vmatmul.mubr.f32.gmra.mxu0 %v333
        %v515 = vpop.f32.mrf.mxu0
        %v516 = vadd.f32 0.0, %v515
        %v517 = vpop.f32.mrf.mxu0
        %v518 = vadd.f32 0.0, %v517
        %519 = vmatprep.mubr.f32.mxu0 0.0
        %520 = vmatmul.mubr.f32.gmra.mxu0 %v336
        %v521 = vpop.f32.mrf.mxu0
        %v522 = vadd.f32 0.0, %v521
        %v523 = vpop.f32.mrf.mxu0
        %v524 = vadd.f32 0.0, %v523
        %525 = vmatprep.mubr.f32.mxu0 0.0
        %526 = vmatmul.mubr.f32.gmra.mxu0 %v339
        %v527 = vpop.f32.mrf.mxu0
        %v528 = vadd.f32 0.0, %v527
        %v529 = vpop.f32.mrf.mxu0
        %v530 = vadd.f32 0.0, %v529
        %531 = vmatprep.mubr.f32.mxu0 0.0
        %532 = vmatmul.mubr.f32.gmra.mxu0 %v342
        %v533 = vpop.f32.mrf.mxu0
        %v534 = vadd.f32 0.0, %v533
        %v535 = vpop.f32.mrf.mxu0
        %v536 = vadd.f32 0.0, %v535
        %537 = vmatprep.mubr.f32.mxu0 0.0
        %538 = vmatmul.mubr.f32.gmra.mxu0 %v345
        %v539 = vpop.f32.mrf.mxu0
        %v540 = vadd.f32 0.0, %v539
        %v541 = vpop.f32.mrf.mxu0
        %v542 = vadd.f32 0.0, %v541
        %543 = vmatprep.mubr.f32.mxu0 0.0
        %544 = vmatmul.mubr.f32.gmra.mxu0 %v348
        %v545 = vpop.f32.mrf.mxu0
        %v546 = vadd.f32 0.0, %v545
        %v547 = vpop.f32.mrf.mxu0
        %v548 = vadd.f32 0.0, %v547
        %549 = vmatprep.mubr.f32.mxu0 0.0
        %550 = vmatmul.mubr.f32.gmra.mxu0 %v351
        %v551 = vpop.f32.mrf.mxu0
        %v552 = vadd.f32 0.0, %v551
        %v553 = vpop.f32.mrf.mxu0
        %v554 = vadd.f32 0.0, %v553
        %555 = vmatprep.mubr.f32.mxu0 0.0
        %556 = vmatmul.mubr.f32.gmra.mxu0 %v354
        %v557 = vpop.f32.mrf.mxu0
        %v558 = vadd.f32 0.0, %v557
        %v559 = vpop.f32.mrf.mxu0
        %v560 = vadd.f32 0.0, %v559
        %561 = vmatprep.mubr.f32.mxu0 0.0
        %562 = vmatmul.mubr.f32.gmra.mxu0 %v357
        %v563 = vpop.f32.mrf.mxu0
        %v564 = vadd.f32 0.0, %v563
        %v565 = vpop.f32.mrf.mxu0
        %v566 = vadd.f32 0.0, %v565
        %567 = vmatprep.mubr.f32.mxu0 0.0
        %568 = vmatmul.mubr.f32.gmra.mxu0 %v360
        %v569 = vpop.f32.mrf.mxu0
        %v570 = vadd.f32 0.0, %v569
        %v571 = vpop.f32.mrf.mxu0
        %v572 = vadd.f32 0.0, %v571
        %573 = vmatprep.mubr.f32.mxu0 0.0
        %574 = vmatmul.mubr.f32.gmra.mxu0 %v363
        %v575 = vpop.f32.mrf.mxu0
        %v576 = vadd.f32 0.0, %v575
        %v577 = vpop.f32.mrf.mxu0
        %v578 = vadd.f32 0.0, %v577
        %579 = vmatprep.mubr.f32.mxu0 0.0
        %580 = vmatmul.mubr.f32.gmra.mxu0 %v366
        %v581 = vpop.f32.mrf.mxu0
        %v582 = vadd.f32 0.0, %v581
        %v583 = vpop.f32.mrf.mxu0
        %v584 = vadd.f32 0.0, %v583
        %585 = vmatprep.mubr.f32.mxu0 0.0
        %586 = vmatmul.mubr.f32.gmra.mxu0 %v369
        %v587 = vpop.f32.mrf.mxu0
        %v588 = vadd.f32 0.0, %v587
        %v589 = vpop.f32.mrf.mxu0
        %v590 = vadd.f32 0.0, %v589
        %591 = vmatprep.mubr.f32.mxu0 0.0
        %592 = vmatmul.mubr.f32.gmra.mxu0 %v372
        %v593 = vpop.f32.mrf.mxu0
        %v594 = vadd.f32 0.0, %v593
        %v595 = vpop.f32.mrf.mxu0
        %v596 = vadd.f32 0.0, %v595
        %597 = vmatprep.mubr.f32.mxu0 0.0
        %598 = vmatmul.mubr.f32.gmra.mxu0 %v375
        %v599 = vpop.f32.mrf.mxu0
        %v600 = vadd.f32 0.0, %v599
        %v601 = vpop.f32.mrf.mxu0
        %v602 = vadd.f32 0.0, %v601
        %603 = vmatprep.mubr.f32.mxu0 0.0
        %604 = vmatmul.mubr.f32.gmra.mxu0 %v378
        %v605 = vpop.f32.mrf.mxu0
        %v606 = vadd.f32 0.0, %v605
        %v607 = vpop.f32.mrf.mxu0
        %v608 = vadd.f32 0.0, %v607
        %609 = vmatprep.mubr.f32.mxu0 0.0
        %610 = vmatmul.mubr.f32.gmra.mxu0 %v381
        %v611 = vpop.f32.mrf.mxu0
        %v612 = vadd.f32 0.0, %v611
        %v613 = vpop.f32.mrf.mxu0
        %v614 = vadd.f32 0.0, %v613
        %615 = vmatprep.mubr.f32.mxu0 0.0
        %616 = vmatmul.mubr.f32.gmra.mxu0 %v384
        %v617 = vpop.f32.mrf.mxu0
        %v618 = vadd.f32 0.0, %v617
        %v619 = vpop.f32.mrf.mxu0
        %v620 = vadd.f32 0.0, %v619
        %621 = vmatprep.mubr.f32.mxu0 0.0
        %622 = vmatmul.mubr.f32.gmra.mxu0 %v387
        %v623 = vpop.f32.mrf.mxu0
        %v624 = vadd.f32 0.0, %v623
        %v625 = vpop.f32.mrf.mxu0
        %v626 = vadd.f32 0.0, %v625
        %627 = vmatprep.mubr.f32.mxu0 0.0
        %628 = vmatmul.mubr.f32.gmra.mxu0 %v390
        %v629 = vpop.f32.mrf.mxu0
        %v630 = vadd.f32 0.0, %v629
        %v631 = vpop.f32.mrf.mxu0
        %v632 = vadd.f32 0.0, %v631
        %633 = vmatprep.mubr.f32.mxu0 0.0
        %634 = vmatmul.mubr.f32.gmra.mxu0 %v393
        %v635 = vpop.f32.mrf.mxu0
        %v636 = vadd.f32 0.0, %v635
        %v637 = vpop.f32.mrf.mxu0
        %v638 = vadd.f32 0.0, %v637
        %639 = vmatprep.mubr.f32.mxu0 0.0
        %640 = vmatmul.mubr.f32.gmra.mxu0 %v396
        %v641 = vpop.f32.mrf.mxu0
        %v642 = vadd.f32 0.0, %v641
        %v643 = vpop.f32.mrf.mxu0
        %v644 = vadd.f32 0.0, %v643
        %645 = vmatprep.mubr.f32.mxu0 0.0
        %646 = vmatmul.mubr.f32.gmra.mxu0 %v399
        %v647 = vpop.f32.mrf.mxu0
        %v648 = vadd.f32 0.0, %v647
        %v649 = vpop.f32.mrf.mxu0
        %v650 = vadd.f32 0.0, %v649
        %651 = vmatprep.mubr.f32.mxu0 0.0
        %652 = vmatmul.mubr.f32.gmra.mxu0 %v402
        %v653 = vpop.f32.mrf.mxu0
        %v654 = vadd.f32 0.0, %v653
        %v655 = vpop.f32.mrf.mxu0
        %v656 = vadd.f32 0.0, %v655
        %657 = vmatprep.mubr.f32.mxu0 0.0
        %658 = vmatmul.mubr.f32.gmra.mxu0 %v405
        %v659 = vpop.f32.mrf.mxu0
        %v660 = vadd.f32 0.0, %v659
        %v661 = vpop.f32.mrf.mxu0
        %v662 = vadd.f32 0.0, %v661
        %663 = vdwg.mxu0
        %v664 = vld [vmem:[#allocation2] sm:$0x3]
        %v665 = vmax.f32 %v474, %v486
        %v666 = vmax.f32 %v480, %v492
        %v667 = vmax.f32 %v665, %v498
        %v668 = vmax.f32 %v666, %v504
        %v669 = vmax.f32 %v667, %v510
        %v670 = vmax.f32 %v668, %v516
        %v671 = vmax.f32 %v669, %v522
        %v672 = vmax.f32 %v670, %v528
        %v673 = vmax.f32 %v671, %v534
        %v674 = vmax.f32 %v672, %v540
        %v675 = vmax.f32 %v673, %v546
        %v676 = vmax.f32 %v674, %v552
        %v677 = vmax.f32 %v675, %v558
        %v678 = vmax.f32 %v676, %v564
        %v679 = vmax.f32 %v677, %v570
        %v680 = vmax.f32 %v678, %v576
        %v681 = vmax.f32 %v679, %v582
        %v682 = vmax.f32 %v680, %v588
        %v683 = vmax.f32 %v681, %v594
        %v684 = vmax.f32 %v682, %v600
        %v685 = vmax.f32 %v683, %v606
        %v686 = vmax.f32 %v684, %v612
        %v687 = vmax.f32 %v685, %v618
        %v688 = vmax.f32 %v686, %v624
        %v689 = vmax.f32 %v687, %v630
        %v690 = vmax.f32 %v688, %v636
        %v691 = vmax.f32 %v689, %v642
        %v692 = vmax.f32 %v690, %v648
        %v693 = vmax.f32 %v691, %v654
        %v694 = vmax.f32 %v692, %v660
        %v695 = vmax.f32 %v693, %v694
        %v696 = vrot.slane %v695, 4
        %v697 = vmax.f32 %v695, %v696
        %v698 = vrot.slane %v697, 2
        %v699 = vmax.f32 %v697, %v698
        %v700 = vrot.slane %v699, 1
        %v701 = vmax.f32 %v699, %v700
        %v702 = vmax.f32 %v476, %v488
        %v703 = vmax.f32 %v482, %v494
        %v704 = vmax.f32 %v702, %v500
        %v705 = vmax.f32 %v703, %v506
        %v706 = vmax.f32 %v704, %v512
        %v707 = vmax.f32 %v705, %v518
        %v708 = vmax.f32 %v706, %v524
        %v709 = vmax.f32 %v707, %v530
        %v710 = vmax.f32 %v708, %v536
        %v711 = vmax.f32 %v709, %v542
        %v712 = vmax.f32 %v710, %v548
        %v713 = vmax.f32 %v711, %v554
        %v714 = vmax.f32 %v712, %v560
        %v715 = vmax.f32 %v713, %v566
        %v716 = vmax.f32 %v714, %v572
        %v717 = vmax.f32 %v715, %v578
        %v718 = vmax.f32 %v716, %v584
        %v719 = vmax.f32 %v717, %v590
        %v720 = vmax.f32 %v718, %v596
        %v721 = vmax.f32 %v719, %v602
        %v722 = vmax.f32 %v720, %v608
        %v723 = vmax.f32 %v721, %v614
        %v724 = vmax.f32 %v722, %v620
        %v725 = vmax.f32 %v723, %v626
        %v726 = vmax.f32 %v724, %v632
        %v727 = vmax.f32 %v725, %v638
        %v728 = vmax.f32 %v726, %v644
        %v729 = vmax.f32 %v727, %v650
        %v730 = vmax.f32 %v728, %v656
        %v731 = vmax.f32 %v729, %v662
        %v732 = vmax.f32 %v730, %v731
        %v733 = vrot.slane %v732, 4
        %v734 = vmax.f32 %v732, %v733
        %v735 = vrot.slane %v734, 2
        %v736 = vmax.f32 %v734, %v735
        %v737 = vrot.slane %v736, 1
        %v738 = vmax.f32 %v736, %v737
        %v741 = vcombine.low %v701, %v738
        %v743 = vunpack.c.l.s4 1966171168
        %v744 = vunpack.c.0.s8 %v743
        %v745 = vlaneseq
        %v746 = vshrl.u32 %v745, 7
        %v747 = vsub.s32 %v744, %v746
        %v748 = vrot.slane %v741, %v747
        %v750 = vunpack.c.l.s4 1966171168
        %v751 = vunpack.c.0.s8 %v750
        %v752 = vlaneseq
        %v753 = vshrl.u32 %v752, 7
        %v754 = vsub.s32 %v751, %v753
        %v755 = vrot.slane %v748, %v754
        %v757 = vmax.f32 %v664, %v755
        %v758 = vsub.f32 %v664, %v757
        %v759 = vmul.f32 %v758, 1.442695
        %v760 = vpow.pop %v759
        %v762 = vlaneseq
        %v763 = vshrl.u32 %v762, 7
        %v764 = vsub.s32 0, %v763
        %v765 = vrot.slane %v757, %v764
        %v766 = vlaneseq
        %v767 = vshrl.u32 %v766, 7
        %v768 = vsub.s32 1, %v767
        %v769 = vrot.slane %v757, %v768
        %v772 = vsub.f32 %v474, %v765
        %v773 = vsub.f32 %v476, %v769
        %v774 = vsub.f32 %v480, %v765
        %v775 = vsub.f32 %v482, %v769
        %v776 = vsub.f32 %v486, %v765
        %v777 = vsub.f32 %v488, %v769
        %v778 = vsub.f32 %v492, %v765
        %v779 = vsub.f32 %v494, %v769
        %v780 = vsub.f32 %v498, %v765
        %v781 = vsub.f32 %v500, %v769
        %v782 = vsub.f32 %v504, %v765
        %v783 = vsub.f32 %v506, %v769
        %v784 = vsub.f32 %v510, %v765
        %v785 = vsub.f32 %v512, %v769
        %v786 = vsub.f32 %v516, %v765
        %v787 = vsub.f32 %v518, %v769
        %v788 = vsub.f32 %v522, %v765
        %v789 = vsub.f32 %v524, %v769
        %v790 = vsub.f32 %v528, %v765
        %v791 = vsub.f32 %v530, %v769
        %v792 = vsub.f32 %v534, %v765
        %v793 = vsub.f32 %v536, %v769
        %v794 = vsub.f32 %v540, %v765
        %v795 = vsub.f32 %v542, %v769
        %v796 = vsub.f32 %v546, %v765
        %v797 = vsub.f32 %v548, %v769
        %v798 = vsub.f32 %v552, %v765
        %v799 = vsub.f32 %v554, %v769
        %v800 = vsub.f32 %v558, %v765
        %v801 = vsub.f32 %v560, %v769
        %v802 = vsub.f32 %v564, %v765
        %v803 = vsub.f32 %v566, %v769
        %v804 = vsub.f32 %v570, %v765
        %v805 = vsub.f32 %v572, %v769
        %v806 = vsub.f32 %v576, %v765
        %v807 = vsub.f32 %v578, %v769
        %v808 = vsub.f32 %v582, %v765
        %v809 = vsub.f32 %v584, %v769
        %v810 = vsub.f32 %v588, %v765
        %v811 = vsub.f32 %v590, %v769
        %v812 = vsub.f32 %v594, %v765
        %v813 = vsub.f32 %v596, %v769
        %v814 = vsub.f32 %v600, %v765
        %v815 = vsub.f32 %v602, %v769
        %v816 = vsub.f32 %v606, %v765
        %v817 = vsub.f32 %v608, %v769
        %v818 = vsub.f32 %v612, %v765
        %v819 = vsub.f32 %v614, %v769
        %v820 = vsub.f32 %v618, %v765
        %v821 = vsub.f32 %v620, %v769
        %v822 = vsub.f32 %v624, %v765
        %v823 = vsub.f32 %v626, %v769
        %v824 = vsub.f32 %v630, %v765
        %v825 = vsub.f32 %v632, %v769
        %v826 = vsub.f32 %v636, %v765
        %v827 = vsub.f32 %v638, %v769
        %v828 = vsub.f32 %v642, %v765
        %v829 = vsub.f32 %v644, %v769
        %v830 = vsub.f32 %v648, %v765
        %v831 = vsub.f32 %v650, %v769
        %v832 = vsub.f32 %v654, %v765
        %v833 = vsub.f32 %v656, %v769
        %v834 = vsub.f32 %v660, %v765
        %v835 = vsub.f32 %v662, %v769
        %v836 = vmul.f32 %v772, 1.442695
        %v837 = vpow.pop %v836
        %v838 = vmul.f32 %v773, 1.442695
        %v839 = vpow.pop %v838
        %v840 = vmul.f32 %v774, 1.442695
        %v841 = vpow.pop %v840
        %v842 = vmul.f32 %v775, 1.442695
        %v843 = vpow.pop %v842
        %v844 = vmul.f32 %v776, 1.442695
        %v845 = vpow.pop %v844
        %v846 = vmul.f32 %v777, 1.442695
        %v847 = vpow.pop %v846
        %v848 = vmul.f32 %v778, 1.442695
        %v849 = vpow.pop %v848
        %v850 = vmul.f32 %v779, 1.442695
        %v851 = vpow.pop %v850
        %v852 = vmul.f32 %v780, 1.442695
        %v853 = vpow.pop %v852
        %v854 = vmul.f32 %v781, 1.442695
        %v855 = vpow.pop %v854
        %v856 = vmul.f32 %v782, 1.442695
        %v857 = vpow.pop %v856
        %v858 = vmul.f32 %v783, 1.442695
        %v859 = vpow.pop %v858
        %v860 = vmul.f32 %v784, 1.442695
        %v861 = vpow.pop %v860
        %v862 = vmul.f32 %v785, 1.442695
        %v863 = vpow.pop %v862
        %v864 = vmul.f32 %v786, 1.442695
        %v865 = vpow.pop %v864
        %v866 = vmul.f32 %v787, 1.442695
        %v867 = vpow.pop %v866
        %v868 = vmul.f32 %v788, 1.442695
        %v869 = vpow.pop %v868
        %v870 = vmul.f32 %v789, 1.442695
        %v871 = vpow.pop %v870
        %v872 = vmul.f32 %v790, 1.442695
        %v873 = vpow.pop %v872
        %v874 = vmul.f32 %v791, 1.442695
        %v875 = vpow.pop %v874
        %v876 = vmul.f32 %v792, 1.442695
        %v877 = vpow.pop %v876
        %v878 = vmul.f32 %v793, 1.442695
        %v879 = vpow.pop %v878
        %v880 = vmul.f32 %v794, 1.442695
        %v881 = vpow.pop %v880
        %v882 = vmul.f32 %v795, 1.442695
        %v883 = vpow.pop %v882
        %v884 = vmul.f32 %v796, 1.442695
        %v885 = vpow.pop %v884
        %v886 = vmul.f32 %v797, 1.442695
        %v887 = vpow.pop %v886
        %v888 = vmul.f32 %v798, 1.442695
        %v889 = vpow.pop %v888
        %v890 = vmul.f32 %v799, 1.442695
        %v891 = vpow.pop %v890
        %v892 = vmul.f32 %v800, 1.442695
        %v893 = vpow.pop %v892
        %v894 = vmul.f32 %v801, 1.442695
        %v895 = vpow.pop %v894
        %v896 = vmul.f32 %v802, 1.442695
        %v897 = vpow.pop %v896
        %v898 = vmul.f32 %v803, 1.442695
        %v899 = vpow.pop %v898
        %v900 = vmul.f32 %v804, 1.442695
        %v901 = vpow.pop %v900
        %v902 = vmul.f32 %v805, 1.442695
        %v903 = vpow.pop %v902
        %v904 = vmul.f32 %v806, 1.442695
        %v905 = vpow.pop %v904
        %v906 = vmul.f32 %v807, 1.442695
        %v907 = vpow.pop %v906
        %v908 = vmul.f32 %v808, 1.442695
        %v909 = vpow.pop %v908
        %v910 = vmul.f32 %v809, 1.442695
        %v911 = vpow.pop %v910
        %v912 = vmul.f32 %v810, 1.442695
        %v913 = vpow.pop %v912
        %v914 = vmul.f32 %v811, 1.442695
        %v915 = vpow.pop %v914
        %v916 = vmul.f32 %v812, 1.442695
        %v917 = vpow.pop %v916
        %v918 = vmul.f32 %v813, 1.442695
        %v919 = vpow.pop %v918
        %v920 = vmul.f32 %v814, 1.442695
        %v921 = vpow.pop %v920
        %v922 = vmul.f32 %v815, 1.442695
        %v923 = vpow.pop %v922
        %v924 = vmul.f32 %v816, 1.442695
        %v925 = vpow.pop %v924
        %v926 = vmul.f32 %v817, 1.442695
        %v927 = vpow.pop %v926
        %v928 = vmul.f32 %v818, 1.442695
        %v929 = vpow.pop %v928
        %v930 = vmul.f32 %v819, 1.442695
        %v931 = vpow.pop %v930
        %v932 = vmul.f32 %v820, 1.442695
        %v933 = vpow.pop %v932
        %v934 = vmul.f32 %v821, 1.442695
        %v935 = vpow.pop %v934
        %v936 = vmul.f32 %v822, 1.442695
        %v937 = vpow.pop %v936
        %v938 = vmul.f32 %v823, 1.442695
        %v939 = vpow.pop %v938
        %v940 = vmul.f32 %v824, 1.442695
        %v941 = vpow.pop %v940
        %v942 = vmul.f32 %v825, 1.442695
        %v943 = vpow.pop %v942
        %v944 = vmul.f32 %v826, 1.442695
        %v945 = vpow.pop %v944
        %v946 = vmul.f32 %v827, 1.442695
        %v947 = vpow.pop %v946
        %v948 = vmul.f32 %v828, 1.442695
        %v949 = vpow.pop %v948
        %v950 = vmul.f32 %v829, 1.442695
        %v951 = vpow.pop %v950
        %v952 = vmul.f32 %v830, 1.442695
        %v953 = vpow.pop %v952
        %v954 = vmul.f32 %v831, 1.442695
        %v955 = vpow.pop %v954
        %v956 = vmul.f32 %v832, 1.442695
        %v957 = vpow.pop %v956
        %v958 = vmul.f32 %v833, 1.442695
        %v959 = vpow.pop %v958
        %v960 = vmul.f32 %v834, 1.442695
        %v961 = vpow.pop %v960
        %v962 = vmul.f32 %v835, 1.442695
        %v963 = vpow.pop %v962
        %v964 = vld [vmem:[#allocation3] sm:$0x3]
        %v965 = vmul.f32 %v760, %v964
        %v966 = vadd.f32 %v837, %v841
        %v967 = vadd.f32 %v966, %v845
        %v968 = vadd.f32 %v967, %v849
        %v969 = vadd.f32 %v968, %v853
        %v970 = vadd.f32 %v969, %v857
        %v971 = vadd.f32 %v970, %v861
        %v972 = vadd.f32 %v971, %v865
        %v973 = vadd.f32 %v972, %v869
        %v974 = vadd.f32 %v973, %v873
        %v975 = vadd.f32 %v974, %v877
        %v976 = vadd.f32 %v975, %v881
        %v977 = vadd.f32 %v976, %v885
        %v978 = vadd.f32 %v977, %v889
        %v979 = vadd.f32 %v978, %v893
        %v980 = vadd.f32 %v979, %v897
        %v981 = vadd.f32 %v980, %v901
        %v982 = vadd.f32 %v981, %v905
        %v983 = vadd.f32 %v982, %v909
        %v984 = vadd.f32 %v983, %v913
        %v985 = vadd.f32 %v984, %v917
        %v986 = vadd.f32 %v985, %v921
        %v987 = vadd.f32 %v986, %v925
        %v988 = vadd.f32 %v987, %v929
        %v989 = vadd.f32 %v988, %v933
        %v990 = vadd.f32 %v989, %v937
        %v991 = vadd.f32 %v990, %v941
        %v992 = vadd.f32 %v991, %v945
        %v993 = vadd.f32 %v992, %v949
        %v994 = vadd.f32 %v993, %v953
        %v995 = vadd.f32 %v994, %v957
        %v996 = vadd.f32 %v995, %v961
        %v997 = vrot.slane %v996, 4
        %v998 = vadd.f32 %v996, %v997
        %v999 = vrot.slane %v998, 2
        %v1000 = vadd.f32 %v998, %v999
        %v1001 = vrot.slane %v1000, 1
        %v1002 = vadd.f32 %v1000, %v1001
        %v1003 = vadd.f32 %v839, %v843
        %v1004 = vadd.f32 %v1003, %v847
        %v1005 = vadd.f32 %v1004, %v851
        %v1006 = vadd.f32 %v1005, %v855
        %v1007 = vadd.f32 %v1006, %v859
        %v1008 = vadd.f32 %v1007, %v863
        %v1009 = vadd.f32 %v1008, %v867
        %v1010 = vadd.f32 %v1009, %v871
        %v1011 = vadd.f32 %v1010, %v875
        %v1012 = vadd.f32 %v1011, %v879
        %v1013 = vadd.f32 %v1012, %v883
        %v1014 = vadd.f32 %v1013, %v887
        %v1015 = vadd.f32 %v1014, %v891
        %v1016 = vadd.f32 %v1015, %v895
        %v1017 = vadd.f32 %v1016, %v899
        %v1018 = vadd.f32 %v1017, %v903
        %v1019 = vadd.f32 %v1018, %v907
        %v1020 = vadd.f32 %v1019, %v911
        %v1021 = vadd.f32 %v1020, %v915
        %v1022 = vadd.f32 %v1021, %v919
        %v1023 = vadd.f32 %v1022, %v923
        %v1024 = vadd.f32 %v1023, %v927
        %v1025 = vadd.f32 %v1024, %v931
        %v1026 = vadd.f32 %v1025, %v935
        %v1027 = vadd.f32 %v1026, %v939
        %v1028 = vadd.f32 %v1027, %v943
        %v1029 = vadd.f32 %v1028, %v947
        %v1030 = vadd.f32 %v1029, %v951
        %v1031 = vadd.f32 %v1030, %v955
        %v1032 = vadd.f32 %v1031, %v959
        %v1033 = vadd.f32 %v1032, %v963
        %v1034 = vrot.slane %v1033, 4
        %v1035 = vadd.f32 %v1033, %v1034
        %v1036 = vrot.slane %v1035, 2
        %v1037 = vadd.f32 %v1035, %v1036
        %v1038 = vrot.slane %v1037, 1
        %v1039 = vadd.f32 %v1037, %v1038
        %v1042 = vcombine.low %v1002, %v1039
        %v1044 = vunpack.c.l.s4 1966171168
        %v1045 = vunpack.c.0.s8 %v1044
        %v1046 = vlaneseq
        %v1047 = vshrl.u32 %v1046, 7
        %v1048 = vsub.s32 %v1045, %v1047
        %v1049 = vrot.slane %v1042, %v1048
        %v1051 = vunpack.c.l.s4 1966171168
        %v1052 = vunpack.c.0.s8 %v1051
        %v1053 = vlaneseq
        %v1054 = vshrl.u32 %v1053, 7
        %v1055 = vsub.s32 %v1052, %v1054
        %v1056 = vrot.slane %v1049, %v1055
        %v1058 = vadd.f32 %v965, %v1056
        %v1059 = vlaneseq
        %vm1060 = vcmp.ge.s32.totalorder %v1059, 0
        %vm1061 = vcmp.lt.s32.totalorder %v1059, 256
        %vm1062 = vmand %vm1060, %vm1061
        %1063 = vst.msk [vmem:[#allocation3] sm:$0x3] %vm1062, %v1058
        %1064 = vmatprep.subr.mxu0 %v899
        %1065 = vmatpush1.msra.mxu0 %v897
        %1066 = vmatprep.subr.mxu0 %v895
        %1067 = vmatpush1.msra.mxu0 %v893
        %1068 = vmatprep.subr.mxu0 %v891
        %1069 = vmatpush1.msra.mxu0 %v889
        %1070 = vmatprep.subr.mxu0 %v887
        %1071 = vmatpush1.msra.mxu0 %v885
        %1072 = vmatprep.subr.mxu0 %v883
        %1073 = vmatpush1.msra.mxu0 %v881
        %1074 = vmatprep.subr.mxu0 %v879
        %1075 = vmatpush1.msra.mxu0 %v877
        %1076 = vmatprep.subr.mxu0 %v875
        %1077 = vmatpush1.msra.mxu0 %v873
        %1078 = vmatprep.subr.mxu0 %v871
        %1079 = vmatpush1.msra.mxu0 %v869
        %1080 = vmatprep.subr.mxu0 %v867
        %1081 = vmatpush1.msra.mxu0 %v865
        %1082 = vmatprep.subr.mxu0 %v863
        %1083 = vmatpush1.msra.mxu0 %v861
        %1084 = vmatprep.subr.mxu0 %v859
        %1085 = vmatpush1.msra.mxu0 %v857
        %1086 = vmatprep.subr.mxu0 %v855
        %1087 = vmatpush1.msra.mxu0 %v853
        %1088 = vmatprep.subr.mxu0 %v851
        %1089 = vmatpush1.msra.mxu0 %v849
        %1090 = vmatprep.subr.mxu0 %v847
        %1091 = vmatpush1.msra.mxu0 %v845
        %1092 = vmatprep.subr.mxu0 %v843
        %1093 = vmatpush1.msra.mxu0 %v841
        %1094 = vmatprep.subr.mxu0 %v839
        %1095 = vmatpush1.msra.mxu0 %v837
        %1096 = vmatprep.subr.mxu0 %v963
        %1097 = vmatpush2.msra.mxu0 %v961
        %1098 = vmatprep.subr.mxu0 %v959
        %1099 = vmatpush2.msra.mxu0 %v957
        %1100 = vmatprep.subr.mxu0 %v955
        %1101 = vmatpush2.msra.mxu0 %v953
        %1102 = vmatprep.subr.mxu0 %v951
        %1103 = vmatpush2.msra.mxu0 %v949
        %1104 = vmatprep.subr.mxu0 %v947
        %1105 = vmatpush2.msra.mxu0 %v945
        %1106 = vmatprep.subr.mxu0 %v943
        %1107 = vmatpush2.msra.mxu0 %v941
        %1108 = vmatprep.subr.mxu0 %v939
        %1109 = vmatpush2.msra.mxu0 %v937
        %1110 = vmatprep.subr.mxu0 %v935
        %1111 = vmatpush2.msra.mxu0 %v933
        %1112 = vmatprep.subr.mxu0 %v931
        %1113 = vmatpush2.msra.mxu0 %v929
        %1114 = vmatprep.subr.mxu0 %v927
        %1115 = vmatpush2.msra.mxu0 %v925
        %1116 = vmatprep.subr.mxu0 %v923
        %1117 = vmatpush2.msra.mxu0 %v921
        %1118 = vmatprep.subr.mxu0 %v919
        %1119 = vmatpush2.msra.mxu0 %v917
        %1120 = vmatprep.subr.mxu0 %v915
        %1121 = vmatpush2.msra.mxu0 %v913
        %1122 = vmatprep.subr.mxu0 %v911
        %1123 = vmatpush2.msra.mxu0 %v909
        %1124 = vmatprep.subr.mxu0 %v907
        %1125 = vmatpush2.msra.mxu0 %v905
        %1126 = vmatprep.subr.mxu0 %v903
        %1127 = vmatpush2.msra.mxu0 %v901
        %1128 = vmatprep.mubr.f32.mxu0 %v245
        %1129 = vmatmul.mubr.f32.gmra.mxu0 %v244
        %v1130 = vpop.f32.mrf.mxu0
        %v1131 = vadd.f32 0.0, %v1130
        %v1132 = vpop.f32.mrf.mxu0
        %v1133 = vadd.f32 0.0, %v1132
        %1134 = vdwg.mxu0
        %v1135 = vld [vmem:[%s226] sm:$0xff]
        %v1136 = vld [vmem:[%s226 + $0x8] sm:$0xff]
        %v1138 = vlaneseq
        %v1139 = vshrl.u32 %v1138, 7
        %v1140 = vsub.s32 0, %v1139
        %v1141 = vrot.slane %v760, %v1140
        %v1142 = vlaneseq
        %v1143 = vshrl.u32 %v1142, 7
        %v1144 = vsub.s32 1, %v1143
        %v1145 = vrot.slane %v760, %v1144
        %v1148 = vmul.f32 %v1141, %v1135
        %v1149 = vmul.f32 %v1145, %v1136
        %v1150 = vadd.f32 %v1148, %v1131
        %v1151 = vadd.f32 %v1149, %v1133
        %1152 = vst [vmem:[%s226] sm:$0xff] %v1150
        %1153 = vst [vmem:[%s226 + $0x8] sm:$0xff] %v1151
        %1154 = vst.msk [vmem:[#allocation2] sm:$0x3] %vm1062, %v757
        // Predicated region
        $region41: #{tpu_custom_call.1} parent=27 // pred_check
          %p1155 = pneg %p230
        $region42: #{tpu_custom_call.1} parent=27 // pred_check_branch
          %1157 = sbr.rel (%p1155) target = $region44
        $region43: #{tpu_custom_call.1} parent=27 // pred_region
          %v1158 = vld [vmem:[#allocation3] sm:$0x3]
          %v1159 = vrcp.pop %v1158
          %v1160 = vmul.f32 1.0, %v1159
          %v1161 = vld [vmem:[%s226] sm:$0xff]
          %v1162 = vld [vmem:[%s226 + $0x8] sm:$0xff]
          %v1164 = vlaneseq
          %v1165 = vshrl.u32 %v1164, 7
          %v1166 = vsub.s32 0, %v1165
          %v1167 = vrot.slane %v1160, %v1166
          %v1168 = vlaneseq
          %v1169 = vshrl.u32 %v1168, 7
          %v1170 = vsub.s32 1, %v1169
          %v1171 = vrot.slane %v1160, %v1170
          %v1174 = vmul.f32 %v1161, %v1167
          %v1175 = vmul.f32 %v1162, %v1171
          %1176 = vst [vmem:[%s226] sm:$0xff] %v1174
          %1177 = vst [vmem:[%s226 + $0x8] sm:$0xff] %v1175
        $region44: #{tpu_custom_call.1} parent=27 // pred_fallthru
          _
        %s1178 = sand.u32 %s107, 1
        %s1179 = scalar_lea.sflag [#allocation6], %s1178
        %s1180 = sand.u32 %s107, 1
        %s1181 = smul.addr %s1180, 16
        %s1182 = scalar_lea.vmem [#allocation9], %s1181
        // Predicated region
        $region45: #{tpu_custom_call.1} parent=27 // pred_check
          %p1183 = pneg %p117
        $region46: #{tpu_custom_call.1} parent=27 // pred_check_branch
          %1185 = sbr.rel (%p1183) target = $region48
        $region47: #{tpu_custom_call.1} parent=27 // pred_region
          %s1186 = smul.u32 2, %s28
          %s1188 = ssub.s32 256, 256
          %1189 = vsyncadd %s1179, %s1188
          %s1190 = smul.addr %s27, 2
          %s1191 = sadd.s32 %s1186, %s1190
          %s1192 = smul.addr %s1191, 128
          %s1193 = scalar_lea.hbm %s2, %s1192
          %s1195 = sshll.u32 %s1182, 4
          %s1196 = int_to_ptr.vmem [resolvable:$true] %s1195
          %1198 = dma.vmem_to_hbm [thread:$0]  %s1196, 256, %s1193, %s1179
        $region48: #{tpu_custom_call.1} parent=27 // pred_fallthru
          _
      $region28: #{tpu_custom_call.1} parent=5 // pred_fallthru
        _
      %p1199 = scmp.le.s32.totalorder 2, %s17
      // Predicated region
      $region49: #{tpu_custom_call.1} parent=5 // pred_check
        %p1200 = pneg %p1199
      $region50: #{tpu_custom_call.1} parent=5 // pred_check_branch
        %1202 = sbr.rel (%p1200) target = $region52
      $region51: #{tpu_custom_call.1} parent=5 // pred_region
        %s1203 = ssub.s32 %s17, 2
        // Predicated region
        $region53: #{tpu_custom_call.1} parent=51 // pred_check
          %p1204 = pneg %p123
        $region54: #{tpu_custom_call.1} parent=51 // pred_check_branch
          %1206 = sbr.rel (%p1204) target = $region56
        $region55: #{tpu_custom_call.1} parent=51 // pred_region
          %s1207 = sand.u32 %s108, 1
          %s1208 = scalar_lea.sflag [#allocation6], %s1207
          %s1209 = sand.u32 %s108, 1
          %s1210 = smul.addr %s1209, 16
          %s1211 = scalar_lea.vmem [#allocation9], %s1210
          %1212 = dma.done %s1208, 256
        $region56: #{tpu_custom_call.1} parent=51 // pred_fallthru
          _
      $region52: #{tpu_custom_call.1} parent=5 // pred_fallthru
        _
    $region6: #{tpu_custom_call.1} parent=1 // loop_footer
      %s21 = sadd.s32 1, %s17
    $region7: #{tpu_custom_call.1} parent=1 // loop_footer_branch
      %16 = sbr.rel target = $region3
    $region8: #{tpu_custom_call.1} parent=1 // loop_exit
      _
    %1213 = vsyncpa [#allocation5], 1
    %s1214 = scalar_lea.sflag [#allocation5], 1
    %1215 = vsyncpa %s1214, 1
    %1216 = vsyncpa [#allocation8], 1
    %s1217 = scalar_lea.sflag [#allocation8], 1
    %1218 = vsyncpa %s1217, 1
    %1219 = vsyncpa [#allocation6], 1
    %s1220 = scalar_lea.sflag [#allocation6], 1
    %1221 = vsyncpa %s1220, 1

</llo_original>
